<compile_context>
chip_gen: v7x
topology: tpu7x:2x2x1
jax: 0.10.0
libtpu: 0.0.40
codegen_flags: <defaults>
</compile_context>

<pallas_src>
import jax
import jax.numpy as jnp
from jax.experimental import pallas as pl
from jax.experimental.pallas import tpu as pltpu

IMAGENET_MEAN = [0.485, 0.456, 0.406]
IMAGENET_STD = [0.229, 0.224, 0.225]


def get_imagenet_params(dtype=jnp.float32):
    """Per-channel constants (the (1,3,R,R) torch buffers are spatially constant,
    so carrying them as 3 scalars each is bit-identical)."""
    mean_c = jnp.asarray(IMAGENET_MEAN, dtype=dtype)  # (3,)
    std_c = jnp.asarray(IMAGENET_STD, dtype=dtype)    # (3,)
    return mean_c, std_c


def _denorm_kernel(x_ref, scale_ref, offset_ref, o_ref):
    # x_ref: (BR, HW); scale/offset: (BR, 1) broadcast across lanes.
    o_ref[...] = x_ref[...] * scale_ref[...] + offset_ref[...]


def _choose_rows_per_block(rows, hw, itemsize, target_bytes=4 << 20):
    """Pick a row-chunk so one block is ~4 MiB (multiple of 8 rows, or full)."""
    br = max(1, target_bytes // max(1, hw * itemsize))
    if br >= rows:
        return rows                      # single block / full second-minor dim
    br = max(8, (br // 8) * 8)           # keep (8,128)-friendly sublane count
    return min(br, rows)


def imagenet_in_normalize(x, mean_c, std_c):
    """x: (N, 3, H, W); mean_c/std_c: (3,) per-channel constants -> (N, 3, H, W)."""
    N, C, H, W = x.shape
    assert C == 3 and mean_c.shape == (C,) and std_c.shape == (C,)

    rows = N * C
    hw = H * W
    itemsize = jnp.dtype(x.dtype).itemsize

    # Free contiguous collapse to a lane-dense 2D slab.
    x2 = x.reshape(rows, hw)
    # Tiny per-row constants (row = n*C + c  ->  channel = row % C).
    scale = jnp.tile(std_c.astype(x.dtype), N).reshape(rows, 1)
    offset = jnp.tile(mean_c.astype(x.dtype), N).reshape(rows, 1)

    br = _choose_rows_per_block(rows, hw, itemsize)
    grid = (pl.cdiv(rows, br),)

    y2 = pl.pallas_call(
        _denorm_kernel,
        out_shape=jax.ShapeDtypeStruct((rows, hw), x.dtype),
        grid_spec=pl.GridSpec(
            grid=grid,
            in_specs=[
                pl.BlockSpec((br, hw), lambda i: (i, 0)),  # x slab
                pl.BlockSpec((br, 1), lambda i: (i, 0)),   # per-row std
                pl.BlockSpec((br, 1), lambda i: (i, 0)),   # per-row mean
            ],
            out_specs=pl.BlockSpec((br, hw), lambda i: (i, 0)),
        ),
        compiler_params=pltpu.CompilerParams(
            dimension_semantics=("parallel",)
        ),
    )(x2, scale, offset)

    return y2.reshape(N, C, H, W)


if __name__ == "__main__":
    resol = 16
    key = jax.random.PRNGKey(0)
    x = jax.random.normal(key, (2, 3, resol, resol), dtype=jnp.float32)

    mean_c, std_c = get_imagenet_params()

    y = imagenet_in_normalize(x, mean_c, std_c)
    jax.block_until_ready(y)

    # Reference (same broadcast semantics as the torch module).
    y_ref = x * std_c[None, :, None, None] + mean_c[None, :, None, None]
    assert jnp.allclose(y, y_ref, atol=1e-6), "mismatch vs reference"

    print("KERNEL_OK")
</pallas_src>

<mosaic_0001>
module attributes {stable_mosaic.version = 11 : i64} {
  func.func @_denorm_kernel(%arg0: i32, %arg1: memref<6x256xf32, #tpu.memory_space<vmem>>, %arg2: memref<6x1xf32, #tpu.memory_space<vmem>>, %arg3: memref<6x1xf32, #tpu.memory_space<vmem>>, %arg4: memref<6x256xf32, #tpu.memory_space<vmem>>) attributes {dimension_semantics = [#tpu.dimension_semantics<parallel>], iteration_bounds = array<i64: 1>, scalar_prefetch = 0 : i64, scratch_operands = 0 : i64, tpu.core_type = #tpu.core_type<tc>, window_params = [{transform_indices = @transform_0, window_bounds = array<i64: 6, 256>}, {transform_indices = @transform_1, window_bounds = array<i64: 6, 1>}, {transform_indices = @transform_2, window_bounds = array<i64: 6, 1>}, {transform_indices = @transform_3, window_bounds = array<i64: 6, 256>}]} {
    %c0 = arith.constant 0 : index
    %c0_0 = arith.constant 0 : index
    %0 = vector.load %arg1[%c0, %c0_0] : memref<6x256xf32, #tpu.memory_space<vmem>>, vector<6x256xf32>
    %c0_1 = arith.constant 0 : index
    %c0_2 = arith.constant 0 : index
    %1 = vector.load %arg2[%c0_1, %c0_2] : memref<6x1xf32, #tpu.memory_space<vmem>>, vector<6x1xf32>
    %2 = vector.broadcast %1 : vector<6x1xf32> to vector<6x256xf32>
    %3 = arith.mulf %0, %2 : vector<6x256xf32>
    %c0_3 = arith.constant 0 : index
    %c0_4 = arith.constant 0 : index
    %4 = vector.load %arg3[%c0_3, %c0_4] : memref<6x1xf32, #tpu.memory_space<vmem>>, vector<6x1xf32>
    %5 = vector.broadcast %4 : vector<6x1xf32> to vector<6x256xf32>
    %6 = arith.addf %3, %5 : vector<6x256xf32>
    %c0_5 = arith.constant 0 : index
    %c0_6 = arith.constant 0 : index
    %7 = vector.load %arg4[%c0_5, %c0_6] : memref<6x256xf32, #tpu.memory_space<vmem>>, vector<6x256xf32>
    tpu.vector_store %arg4[%c0_5, %c0_6], %6 {strides = array<i32>} : memref<6x256xf32, #tpu.memory_space<vmem>>, vector<6x256xf32>,
    return
  }
  func.func @transform_0(%arg0: i32) -> (i32, i32) {
    %c0_i32 = arith.constant 0 : i32
    %c0_i32_0 = arith.constant 0 : i32
    return %arg0, %c0_i32 : i32, i32
  }
  func.func @transform_1(%arg0: i32) -> (i32, i32) {
    %c0_i32 = arith.constant 0 : i32
    %c0_i32_0 = arith.constant 0 : i32
    return %arg0, %c0_i32 : i32, i32
  }
  func.func @transform_2(%arg0: i32) -> (i32, i32) {
    %c0_i32 = arith.constant 0 : i32
    %c0_i32_0 = arith.constant 0 : i32
    return %arg0, %c0_i32 : i32, i32
  }
  func.func @transform_3(%arg0: i32) -> (i32, i32) {
    %c0_i32 = arith.constant 0 : i32
    %c0_i32_0 = arith.constant 0 : i32
    return %arg0, %c0_i32 : i32, i32
  }
}

</mosaic_0001>

<llo_original>
// kernel: tpu_custom_call.1
$region0: #{tpu_custom_call.1}
  #allocation0 [shape = 'u32[]', space=smem, size = 0x4, offset = 0x4, fixed_abs, tag = 'smem constant byte address 0x4 - core index']
  #allocation1 [shape = 'u32[144,128]{1,0:T(1,128)}', space=vmem, size = 0x12000, scoped, tag = 'internal scratch']
  %s0 = inlined_call_operand.vmem [shape: f32[6,256], index: 0, kind: input, shape index: {}]
  %s1 = inlined_call_operand.vmem [shape: f32[6,1], index: 1, kind: input, shape index: {}]
  %s2 = inlined_call_operand.vmem [shape: f32[6,1], index: 2, kind: input, shape index: {}]
  %s3 = inlined_call_operand.hbm [shape: f32[6,256], index: 3, kind: output, shape index: {}]
  %s4 = sld [smem:[#allocation0]]
  $region22: #{tpu_custom_call.1} parent=0
    _
  %s6 = ssub.s32 1, %s4
  %s7 = scalar_select 0, %s6, %s4
  $region1: #{tpu_custom_call.1} parent=0
    #allocation2 [shape = 'u8[8192]{0}', space=vmem, size = 0x2000, scoped, tag = 'output window, operand 0, single buffered']
    #allocation3 [shape = 's32[1]{0}', space=sflag, size = 0x4, scoped, tag = 'scoped memory for tpu_custom_call.1']
    %8 = vsyncpa [#allocation3], 0
    // Predicated region
    $region2: #{tpu_custom_call.1} parent=1 // pred_check
      _
    $region3: #{tpu_custom_call.1} parent=1 // pred_check_branch
      %10 = sbr.rel (0) target = $region5
    $region4: #{tpu_custom_call.1} parent=1 // pred_region
      _
    $region5: #{tpu_custom_call.1} parent=1 // pred_fallthru
      _
    // Predicated region
    $region6: #{tpu_custom_call.1} parent=1 // pred_check
      _
    $region7: #{tpu_custom_call.1} parent=1 // pred_check_branch
      %12 = sbr.rel (0) target = $region9
    $region8: #{tpu_custom_call.1} parent=1 // pred_region
      _
    $region9: #{tpu_custom_call.1} parent=1 // pred_fallthru
      _
    // Predicated region
    $region10: #{tpu_custom_call.1} parent=1 // pred_check
      _
    $region11: #{tpu_custom_call.1} parent=1 // pred_check_branch
      %14 = sbr.rel (0) target = $region13
    $region12: #{tpu_custom_call.1} parent=1 // pred_region
      _
    $region13: #{tpu_custom_call.1} parent=1 // pred_fallthru
      _
    %v15 = vld [vmem:[%s0] sm:$0x3f]
    %v16 = vld [vmem:[%s0 + $0x8] sm:$0x3f]
    %v17 = vld [vmem:[%s1] sm:$0x3f]
    %19 = vset.pattern.permute.xlu0 0
    %20 = vperm.xlu0 %19, %v17
    %v21 = vpop.permute.xlu0 %20
    %v23 = vmul.f32 %v15, %v21
    %v24 = vmul.f32 %v16, %v21
    %v25 = vld [vmem:[%s2] sm:$0x3f]
    %27 = vset.pattern.permute.xlu0 0
    %28 = vperm.xlu0 %27, %v25
    %v29 = vpop.permute.xlu0 %28
    %v31 = vadd.f32 %v23, %v29
    %v32 = vadd.f32 %v24, %v29
    %33 = vst [vmem:[#allocation2] sm:$0x3f] %v31
    %34 = vst [vmem:[#allocation2 + $0x8] sm:$0x3f] %v32
    // Predicated region
    $region14: #{tpu_custom_call.1} parent=1 // pred_check
      _
    $region15: #{tpu_custom_call.1} parent=1 // pred_check_branch
      %36 = sbr.rel (0) target = $region17
    $region16: #{tpu_custom_call.1} parent=1 // pred_region
      %s38 = ssub.s32 256, 256
      %39 = vsyncadd [#allocation3], %s38
      %s41 = sshll.u32 [#allocation2], 4
      %s42 = int_to_ptr.vmem [resolvable:$true] %s41
      %44 = dma.vmem_to_hbm [thread:$0]  %s42, 256, %s3, [#allocation3]
    $region17: #{tpu_custom_call.1} parent=1 // pred_fallthru
      _
    // Predicated region
    $region18: #{tpu_custom_call.1} parent=1 // pred_check
      _
    $region19: #{tpu_custom_call.1} parent=1 // pred_check_branch
      %46 = sbr.rel (0) target = $region21
    $region20: #{tpu_custom_call.1} parent=1 // pred_region
      %47 = dma.done [#allocation3], 256
    $region21: #{tpu_custom_call.1} parent=1 // pred_fallthru
      _
    %48 = vsyncpa [#allocation3], 1

</llo_original>
